<compile_context>
chip_gen: v7x
topology: tpu7x:2x2x1
jax: 0.10.0
libtpu: 0.0.40
codegen_flags: <defaults>
</compile_context>

<pallas_src>
import functools

import jax
import jax.numpy as jnp
from jax.experimental import pallas as pl
from jax.experimental.pallas import tpu as pltpu


def _cdiv(a, b):
    return -(-a // b)


def _round_up(a, m):
    return _cdiv(a, m) * m


def _pad_axis(x, target, axis):
    pad = target - x.shape[axis]
    if pad == 0:
        return x
    widths = [(0, 0)] * x.ndim
    widths[axis] = (0, pad)
    return jnp.pad(x, widths)


# ----------------------------------------------------------------------------
# Pallas kernel
#   out[i, j-tile] = tanh(x[i] @ W1 + b1) @ W2[:, j-tile] + b2[j-tile]
#   grid = (row_tiles, vocab_col_tiles); h computed once per row tile (j == 0)
#   into VMEM scratch and reused across vocab tiles.
# ----------------------------------------------------------------------------
def _mlp_kernel(x_ref, w1_ref, b1_ref, w2_ref, b2_ref, o_ref, h_ref):
    # INVARIANT: vocab axis (grid axis 1) is innermost and "arbitrary", so the
    # h_ref scratch written at j == 0 is valid for every j of this row tile.
    @pl.when(pl.program_id(1) == 0)
    def _():
        h = jnp.dot(x_ref[...], w1_ref[...], preferred_element_type=jnp.float32)
        h_ref[...] = jnp.tanh(h + b1_ref[...]).astype(h_ref.dtype)

    out = jnp.dot(h_ref[...], w2_ref[...], preferred_element_type=jnp.float32)
    o_ref[...] = (out + b2_ref[...]).astype(o_ref.dtype)


# ----------------------------------------------------------------------------
# One-time weight preparation (hoisted out of the per-call / jit path)
# ----------------------------------------------------------------------------
def prepare_mlp_weights(w1, b1, w2, b2, wte=None, *, compute_dtype=jnp.bfloat16):
    """Pad weights to lane-dense multiples of 128 and cast to compute dtype ONCE."""
    d_in, h = w1.shape
    v = w2.shape[1]
    dp, hp, vp = _round_up(d_in, 128), _round_up(h, 128), _round_up(v, 128)
    prepared = {
        "w1p": _pad_axis(_pad_axis(w1, dp, 0), hp, 1).astype(compute_dtype),
        "b1p": _pad_axis(b1, hp, 1).astype(jnp.float32),
        "w2p": _pad_axis(_pad_axis(w2, hp, 0), vp, 1).astype(compute_dtype),
        "b2p": _pad_axis(b2, vp, 1).astype(jnp.float32),
    }
    if wte is not None:
        prepared["wte"] = wte.astype(compute_dtype)   # bf16 gather → bf16 x directly
    return prepared


# ----------------------------------------------------------------------------
# Pallas-backed MLP forward (weights already padded / cast)
# ----------------------------------------------------------------------------
def mlp_forward_pallas(x, w1p, b1p, w2p, b2p, *, out_cols=None, tm=512, tv=2048,
                       out_dtype=jnp.bfloat16,
                       vmem_budget_bytes=48 * 1024 * 1024):
    """x: (M, D_in) -> (M, out_cols) logits via tanh-MLP in one Pallas kernel."""
    M, d_in = x.shape
    Dp, Hp = w1p.shape
    Vp = w2p.shape[1]
    compute_dtype = w1p.dtype
    cbytes = jnp.dtype(compute_dtype).itemsize
    obytes = jnp.dtype(out_dtype).itemsize

    # 16-row alignment keeps bf16 tiles on native (16,128) sublane packing.
    row_align = 16 if cbytes == 2 else 8

    def row_tiling(tile):
        # Balanced tiles; prefer >=2 row tiles (v7x megacore) when M allows.
        n = max(_cdiv(M, tile), 2 if M >= 2 * row_align else 1)
        t = _round_up(_cdiv(M, n), row_align)
        return n, t, n * t

    def vocab_tile(start):
        # Largest multiple of 128 that divides Vp and is <= start (no V over-pad).
        t = max(128, (start // 128) * 128)
        while Vp % t != 0:
            t -= 128
        return t

    def vmem_need(tm_, tv_):
        return (2 * tm_ * Dp * cbytes        # x tiles (double-buffered)
                + 2 * Dp * Hp * cbytes       # W1 (grid-invariant, default 2 bufs)
                + 2 * Hp * 4                 # b1
                + 2 * Hp * tv_ * cbytes      # W2 column tiles
                + 2 * tv_ * 4                # b2 tiles
                + 2 * tm_ * tv_ * obytes     # out tiles
                + tm_ * Hp * cbytes)         # hidden-activation scratch
    # NOTE: pipeline_mode=pl.Buffered(1) on the grid-invariant W1/b1 specs would
    # shave Dp*Hp*cbytes off this footprint on v7x; left out to keep the build safe.

    n_row, tm_eff, Mp = row_tiling(tm)
    tv_eff = vocab_tile(min(tv, Vp))
    while vmem_need(tm_eff, tv_eff) > vmem_budget_bytes:
        if tv_eff > 128:
            tv_eff = vocab_tile(tv_eff - 128)      # shrink vocab tile first
        elif tm_eff > row_align:
            n_row, tm_eff, Mp = row_tiling(max(row_align, tm_eff // 2))
        else:
            break

    # Pad activations only (weights are pre-padded); already bf16 if wte was bf16.
    xp = _pad_axis(_pad_axis(x, Mp, 0), Dp, 1).astype(compute_dtype)

    grid = (n_row, Vp // tv_eff)

    cost = pl.CostEstimate(
        flops=2 * Mp * Dp * Hp + 2 * Mp * Hp * Vp,
        transcendentals=Mp * Hp,
        bytes_accessed=(Mp * Dp * cbytes + Dp * Hp * cbytes
                        + n_row * Hp * Vp * cbytes + Mp * Vp * obytes
                        + Hp * 4 + Vp * 4),
    )

    vmem_limit = int(min(max(vmem_need(tm_eff, tv_eff) + (4 << 20), 32 << 20),
                         56 << 20))

    out = pl.pallas_call(
        _mlp_kernel,
        out_shape=jax.ShapeDtypeStruct((Mp, Vp), out_dtype),
        grid_spec=pltpu.PrefetchScalarGridSpec(
            num_scalar_prefetch=0,
            grid=grid,
            in_specs=[
                pl.BlockSpec((tm_eff, Dp), lambda i, j: (i, 0)),   # x rows
                pl.BlockSpec((Dp, Hp), lambda i, j: (0, 0)),       # W1 (resident)
                pl.BlockSpec((1, Hp), lambda i, j: (0, 0)),        # b1
                pl.BlockSpec((Hp, tv_eff), lambda i, j: (0, j)),   # W2 column tile
                pl.BlockSpec((1, tv_eff), lambda i, j: (0, j)),    # b2 column tile
            ],
            out_specs=pl.BlockSpec((tm_eff, tv_eff), lambda i, j: (i, j)),
            scratch_shapes=[pltpu.VMEM((tm_eff, Hp), compute_dtype)],  # hidden acts
        ),
        compiler_params=pltpu.CompilerParams(
            dimension_semantics=("parallel", "arbitrary"),
            vmem_limit_bytes=vmem_limit,
        ),
        cost_estimate=cost,
    )(xp, w1p, b1p, w2p, b2p)

    out_cols = Vp if out_cols is None else out_cols
    if Mp == M and out_cols == Vp:
        return out                      # no post-kernel slice copy
    return out[:M, :out_cols]


# ----------------------------------------------------------------------------
# Full module forward (embedding gather in JAX, MLP in Pallas)
# ----------------------------------------------------------------------------
def mlp_lm_forward(idx, prepared, *, block_size, vocab_size):
    """
    Mirrors MLP.forward(idx, targets=None) from the PyTorch reference.
    idx: (B, T) int32 token ids in [0, vocab_size).  Returns (logits, None).
    """
    wte = prepared["wte"]
    B, T = idx.shape
    n_embd = wte.shape[1]

    # Single fused gather replacing the torch roll/concat loop:
    # slot k at position t holds token idx[:, t-k], or the blank token
    # (id = vocab_size) when t-k < 0.  wte is bf16 so x is built in bf16.
    t = jnp.arange(T)[:, None]                       # (T, 1)
    k = jnp.arange(block_size)[None, :]              # (1, block_size)
    src = t - k                                      # (T, block_size)
    gathered = idx[:, jnp.clip(src, 0, T - 1)]       # (B, T, block_size)
    tok = jnp.where(src >= 0, gathered, vocab_size)  # blank for out-of-range
    x = jnp.take(wte, tok, axis=0)                   # (B, T, block_size, n_embd)
    x2d = x.reshape(B * T, block_size * n_embd)
    # TODO(synk): fully fuse this gather into the kernel via scalar-prefetched
    # token ids to eliminate the (B*T, block_size*n_embd) HBM intermediate.

    logits2d = mlp_forward_pallas(x2d, prepared["w1p"], prepared["b1p"],
                                  prepared["w2p"], prepared["b2p"],
                                  out_cols=vocab_size)
    logits = logits2d.reshape(B, T, vocab_size)

    # TODO(synk): cross-entropy loss branch (targets is not None) not implemented;
    # forward is exercised with targets=None -> loss=None.
    return logits, None


# ----------------------------------------------------------------------------
# Deterministic parameter init (shapes per MLP.__init__)
# ----------------------------------------------------------------------------
def init_params(key, *, n_embd, n_embd2, block_size, vocab_size):
    k0, k1, k2, k3, k4 = jax.random.split(key, 5)
    d_in = block_size * n_embd
    params = {
        "wte": jax.random.normal(k0, (vocab_size + 1, n_embd), jnp.float32) * 0.02,
        # stored transposed vs torch.nn.Linear.weight so kernel computes x @ W + b
        "w1": jax.random.normal(k1, (d_in, n_embd2), jnp.float32) / jnp.sqrt(d_in),
        "b1": jax.random.normal(k2, (1, n_embd2), jnp.float32) * 0.01,
        "w2": jax.random.normal(k3, (n_embd2, vocab_size), jnp.float32) / jnp.sqrt(n_embd2),
        "b2": jax.random.normal(k4, (1, vocab_size), jnp.float32) * 0.01,
    }
    return params


if __name__ == "__main__":
    # Small, forward-consistent shapes.
    B, T = 2, 8
    n_embd, n_embd2 = 16, 32
    block_size, vocab_size = 8, 27

    key = jax.random.PRNGKey(0)
    pkey, ikey = jax.random.split(key)
    params = init_params(pkey, n_embd=n_embd, n_embd2=n_embd2,
                         block_size=block_size, vocab_size=vocab_size)
    prepared = prepare_mlp_weights(params["w1"], params["b1"],
                                   params["w2"], params["b2"],
                                   wte=params["wte"])
    idx = jax.random.randint(ikey, (B, T), 0, vocab_size, dtype=jnp.int32)

    fwd = jax.jit(functools.partial(mlp_lm_forward,
                                    block_size=block_size, vocab_size=vocab_size))
    logits, loss = fwd(idx, prepared)
    jax.block_until_ready(logits)

    assert logits.shape == (B, T, vocab_size)
    assert loss is None

    logits2d = logits.reshape(B * T, vocab_size).astype(jnp.float32)

    # Reference embedding built exactly like the torch roll loop (validates gather),
    # in bf16 to match the kernel's gather dtype.
    wte_bf = params["wte"].astype(jnp.bfloat16)
    embs, cur = [], idx
    for _ in range(block_size):
        embs.append(jnp.take(wte_bf, cur, axis=0))
        cur = jnp.roll(cur, 1, axis=1).at[:, 0].set(vocab_size)
    x_ref2d = jnp.concatenate(embs, -1).reshape(B * T, block_size * n_embd)

    # Reference matching the kernel's bf16-operand / f32-accumulate / bf16-store path.
    w1b = params["w1"].astype(jnp.bfloat16)
    w2b = params["w2"].astype(jnp.bfloat16)
    h = jnp.tanh(jnp.dot(x_ref2d, w1b, preferred_element_type=jnp.float32)
                 + params["b1"]).astype(jnp.bfloat16)
    ref_bf16 = jnp.dot(h, w2b, preferred_element_type=jnp.float32) + params["b2"]
    assert jnp.allclose(logits2d, ref_bf16, atol=2e-2, rtol=2e-2)

    # Loose end-to-end check against the full-f32 reference math.
    embs_f, cur = [], idx
    for _ in range(block_size):
        embs_f.append(jnp.take(params["wte"], cur, axis=0))
        cur = jnp.roll(cur, 1, axis=1).at[:, 0].set(vocab_size)
    x_f32 = jnp.concatenate(embs_f, -1).reshape(B * T, block_size * n_embd)
    ref_f32 = (jnp.tanh(x_f32 @ params["w1"] + params["b1"]) @ params["w2"]
               + params["b2"])
    assert jnp.allclose(logits2d, ref_f32, atol=5e-2, rtol=5e-2)

    print("KERNEL_OK")
</pallas_src>

<mosaic_0001>
module attributes {stable_mosaic.version = 11 : i64} {
  func.func @_mlp_kernel(%arg0: i32, %arg1: i32, %arg2: memref<16x128xbf16, #tpu.memory_space<vmem>>, %arg3: memref<128x128xbf16, #tpu.memory_space<vmem>>, %arg4: memref<1x128xf32, #tpu.memory_space<vmem>>, %arg5: memref<128x128xbf16, #tpu.memory_space<vmem>>, %arg6: memref<1x128xf32, #tpu.memory_space<vmem>>, %arg7: memref<16x128xbf16, #tpu.memory_space<vmem>>, %arg8: memref<16x128xbf16, #tpu.memory_space<vmem>>) attributes {dimension_semantics = [#tpu.dimension_semantics<parallel>, #tpu.dimension_semantics<arbitrary>], iteration_bounds = array<i64: 1, 1>, scalar_prefetch = 0 : i64, scratch_operands = 1 : i64, tpu.core_type = #tpu.core_type<tc>, window_params = [{transform_indices = @transform_0, window_bounds = array<i64: 16, 128>}, {pipeline_mode = #tpu.pipeline_mode<synchronous>, transform_indices = @transform_1, window_bounds = array<i64: 128, 128>}, {pipeline_mode = #tpu.pipeline_mode<synchronous>, transform_indices = @transform_2, window_bounds = array<i64: 1, 128>}, {transform_indices = @transform_3, window_bounds = array<i64: 128, 128>}, {transform_indices = @transform_4, window_bounds = array<i64: 1, 128>}, {transform_indices = @transform_5, window_bounds = array<i64: 16, 128>}]} {
    %c0_i32 = arith.constant 0 : i32
    %0 = arith.cmpi eq, %arg1, %c0_i32 : i32
    %1 = arith.extui %0 : i1 to i32
    %c0_i32_0 = arith.constant 0 : i32
    %2 = arith.cmpi ne, %1, %c0_i32_0 : i32
    scf.if %2 {
      %c0_8 = arith.constant 0 : index
      %c0_9 = arith.constant 0 : index
      %11 = vector.load %arg2[%c0_8, %c0_9] : memref<16x128xbf16, #tpu.memory_space<vmem>>, vector<16x128xbf16>
      %c0_10 = arith.constant 0 : index
      %c0_11 = arith.constant 0 : index
      %12 = vector.load %arg3[%c0_10, %c0_11] : memref<128x128xbf16, #tpu.memory_space<vmem>>, vector<128x128xbf16>
      %cst_12 = arith.constant dense<0.000000e+00> : vector<16x128xf32>
      %13 = tpu.matmul %11, %12, %cst_12 {dimension_numbers = #tpu.dot_dimension_numbers<[1], [0], [0], [1], [0, 0, 1, 1], [], []>} : vector<16x128xbf16>, vector<128x128xbf16>, vector<16x128xf32> -> vector<16x128xf32>
      %c0_13 = arith.constant 0 : index
      %c0_14 = arith.constant 0 : index
      %14 = vector.load %arg4[%c0_13, %c0_14] : memref<1x128xf32, #tpu.memory_space<vmem>>, vector<1x128xf32>
      %15 = vector.broadcast %14 : vector<1x128xf32> to vector<16x128xf32>
      %16 = arith.addf %13, %15 : vector<16x128xf32>
      %17 = math.tanh %16 : vector<16x128xf32>
      %18 = arith.truncf %17 : vector<16x128xf32> to vector<16x128xbf16>
      %c0_15 = arith.constant 0 : index
      %c0_16 = arith.constant 0 : index
      %19 = vector.load %arg8[%c0_15, %c0_16] : memref<16x128xbf16, #tpu.memory_space<vmem>>, vector<16x128xbf16>
      tpu.vector_store %arg8[%c0_15, %c0_16], %18 {strides = array<i32>} : memref<16x128xbf16, #tpu.memory_space<vmem>>, vector<16x128xbf16>,
    } else {
    }
    %c0 = arith.constant 0 : index
    %c0_1 = arith.constant 0 : index
    %3 = vector.load %arg8[%c0, %c0_1] : memref<16x128xbf16, #tpu.memory_space<vmem>>, vector<16x128xbf16>
    %c0_2 = arith.constant 0 : index
    %c0_3 = arith.constant 0 : index
    %4 = vector.load %arg5[%c0_2, %c0_3] : memref<128x128xbf16, #tpu.memory_space<vmem>>, vector<128x128xbf16>
    %cst = arith.constant dense<0.000000e+00> : vector<16x128xf32>
    %5 = tpu.matmul %3, %4, %cst {dimension_numbers = #tpu.dot_dimension_numbers<[1], [0], [0], [1], [0, 0, 1, 1], [], []>} : vector<16x128xbf16>, vector<128x128xbf16>, vector<16x128xf32> -> vector<16x128xf32>
    %c0_4 = arith.constant 0 : index
    %c0_5 = arith.constant 0 : index
    %6 = vector.load %arg6[%c0_4, %c0_5] : memref<1x128xf32, #tpu.memory_space<vmem>>, vector<1x128xf32>
    %7 = vector.broadcast %6 : vector<1x128xf32> to vector<16x128xf32>
    %8 = arith.addf %5, %7 : vector<16x128xf32>
    %9 = arith.truncf %8 : vector<16x128xf32> to vector<16x128xbf16>
    %c0_6 = arith.constant 0 : index
    %c0_7 = arith.constant 0 : index
    %10 = vector.load %arg7[%c0_6, %c0_7] : memref<16x128xbf16, #tpu.memory_space<vmem>>, vector<16x128xbf16>
    tpu.vector_store %arg7[%c0_6, %c0_7], %9 {strides = array<i32>} : memref<16x128xbf16, #tpu.memory_space<vmem>>, vector<16x128xbf16>,
    return
  }
  func.func @transform_0(%arg0: i32, %arg1: i32) -> (i32, i32) {
    %c0_i32 = arith.constant 0 : i32
    %c0_i32_0 = arith.constant 0 : i32
    return %arg0, %c0_i32 : i32, i32
  }
  func.func @transform_1(%arg0: i32, %arg1: i32) -> (i32, i32) {
    %c0_i32 = arith.constant 0 : i32
    %c0_i32_0 = arith.constant 0 : i32
    %c0_i32_1 = arith.constant 0 : i32
    return %c0_i32, %c0_i32_0 : i32, i32
  }
  func.func @transform_2(%arg0: i32, %arg1: i32) -> (i32, i32) {
    %c0_i32 = arith.constant 0 : i32
    %c0_i32_0 = arith.constant 0 : i32
    %c0_i32_1 = arith.constant 0 : i32
    return %c0_i32, %c0_i32_0 : i32, i32
  }
  func.func @transform_3(%arg0: i32, %arg1: i32) -> (i32, i32) {
    %c0_i32 = arith.constant 0 : i32
    %c0_i32_0 = arith.constant 0 : i32
    return %c0_i32, %arg1 : i32, i32
  }
  func.func @transform_4(%arg0: i32, %arg1: i32) -> (i32, i32) {
    %c0_i32 = arith.constant 0 : i32
    %c0_i32_0 = arith.constant 0 : i32
    return %c0_i32, %arg1 : i32, i32
  }
  func.func @transform_5(%arg0: i32, %arg1: i32) -> (i32, i32) {
    %c0_i32 = arith.constant 0 : i32
    return %arg0, %arg1 : i32, i32
  }
}

</mosaic_0001>

<llo_original>
// kernel: mlp_lm_forward.1
$region0: #{mlp_lm_forward.1}
  #allocation0 [shape = 'u32[]', space=smem, size = 0x4, offset = 0x4, fixed_abs, tag = 'smem constant byte address 0x4 - core index']
  #allocation1 [shape = 'u32[144,128]{1,0:T(1,128)}', space=vmem, size = 0x12000, scoped, tag = 'internal scratch']
  #allocation2 [shape = 'bf16[16,128]{1,0:T(16,128)(2,1)}', space=vmem, size = 0x1000, scoped, tag = 'scratch operand']
  %s0 = inlined_call_operand.vmem [shape: bf16[16,128], index: 0, kind: input, shape index: {}]
  %s1 = inlined_call_operand.vmem [shape: bf16[128,128], index: 1, kind: input, shape index: {}]
  %s2 = inlined_call_operand.vmem [shape: f32[1,128], index: 2, kind: input, shape index: {}]
  %s3 = inlined_call_operand.vmem [shape: bf16[128,128], index: 3, kind: input, shape index: {}]
  %s4 = inlined_call_operand.vmem [shape: f32[1,128], index: 4, kind: input, shape index: {}]
  %s5 = inlined_call_operand.vmem [shape: bf16[16,128], index: 5, kind: output, shape index: {}]
  %s6 = sld [smem:[#allocation0]]
  $region34: #{mlp_lm_forward.1} parent=0
    _
  %s8 = ssub.s32 1, %s6
  %s9 = scalar_select 0, %s8, %s6
  // Predicated region
  $region2: #{mlp_lm_forward.1} parent=0 // pred_check
    _
  $region3: #{mlp_lm_forward.1} parent=0 // pred_check_branch
    %11 = sbr.rel (0) target = $region5
  $region4: #{mlp_lm_forward.1} parent=0 // pred_region
    _
  $region5: #{mlp_lm_forward.1} parent=0 // pred_fallthru
    _
  // Predicated region
  $region6: #{mlp_lm_forward.1} parent=0 // pred_check
    _
  $region7: #{mlp_lm_forward.1} parent=0 // pred_check_branch
    %13 = sbr.rel (0) target = $region9
  $region8: #{mlp_lm_forward.1} parent=0 // pred_region
    _
  $region9: #{mlp_lm_forward.1} parent=0 // pred_fallthru
    _
  // Predicated region
  $region10: #{mlp_lm_forward.1} parent=0 // pred_check
    _
  $region11: #{mlp_lm_forward.1} parent=0 // pred_check_branch
    %15 = sbr.rel (0) target = $region13
  $region12: #{mlp_lm_forward.1} parent=0 // pred_region
    _
  $region13: #{mlp_lm_forward.1} parent=0 // pred_fallthru
    _
  // Predicated region
  $region14: #{mlp_lm_forward.1} parent=0 // pred_check
    _
  $region15: #{mlp_lm_forward.1} parent=0 // pred_check_branch
    %17 = sbr.rel (0) target = $region17
  $region16: #{mlp_lm_forward.1} parent=0 // pred_region
    _
  $region17: #{mlp_lm_forward.1} parent=0 // pred_fallthru
    _
  // Predicated region
  $region18: #{mlp_lm_forward.1} parent=0 // pred_check
    _
  $region19: #{mlp_lm_forward.1} parent=0 // pred_check_branch
    %19 = sbr.rel (0) target = $region21
  $region20: #{mlp_lm_forward.1} parent=0 // pred_region
    _
  $region21: #{mlp_lm_forward.1} parent=0 // pred_fallthru
    _
  %p21 = scmp.eq.s32.totalorder 0, 0
  // Predicated region
  $region22: #{mlp_lm_forward.1} parent=0 // pred_check
    %p22 = pneg %p21
  $region23: #{mlp_lm_forward.1} parent=0 // pred_check_branch
    %24 = sbr.rel (%p22) target = $region25
  $region24: #{mlp_lm_forward.1} parent=0 // pred_region
    %v25 = vld [vmem:[%s0] sm:$0xf]
    %v26 = vld [vmem:[%s0 + $0x4] sm:$0xf]
    %v27 = vld [vmem:[%s1] sm:$0xf]
    %v28 = vld [vmem:[%s1 + $0x4] sm:$0xf]
    %v29 = vld [vmem:[%s1 + $0x8] sm:$0xf]
    %v30 = vld [vmem:[%s1 + $0xc] sm:$0xf]
    %v31 = vld [vmem:[%s1 + $0x10] sm:$0xf]
    %v32 = vld [vmem:[%s1 + $0x14] sm:$0xf]
    %v33 = vld [vmem:[%s1 + $0x18] sm:$0xf]
    %v34 = vld [vmem:[%s1 + $0x1c] sm:$0xf]
    %v35 = vld [vmem:[%s1 + $0x20] sm:$0xf]
    %v36 = vld [vmem:[%s1 + $0x24] sm:$0xf]
    %v37 = vld [vmem:[%s1 + $0x28] sm:$0xf]
    %v38 = vld [vmem:[%s1 + $0x2c] sm:$0xf]
    %v39 = vld [vmem:[%s1 + $0x30] sm:$0xf]
    %v40 = vld [vmem:[%s1 + $0x34] sm:$0xf]
    %v41 = vld [vmem:[%s1 + $0x38] sm:$0xf]
    %v42 = vld [vmem:[%s1 + $0x3c] sm:$0xf]
    %v43 = vld [vmem:[%s2] sm:$0x1]
    %v45 = vlaneseq
    %v46 = vshrl.u32 %v45, 7
    %v47 = vsub.s32 0, %v46
    %v48 = vrot.slane %v43, %v47
    %v52 = vunpack.c.l.b16 %v25
    %v53 = vunpack.c.l.b16 %v26
    %v54 = vpack.c.b16 %v53, %v52
    %v72 = vunpack.c.l.b16 %v27
    %v73 = vunpack.c.l.b16 %v28
    %v74 = vunpack.c.l.b16 %v29
    %v75 = vunpack.c.l.b16 %v30
    %v76 = vunpack.c.l.b16 %v31
    %v77 = vunpack.c.l.b16 %v32
    %v78 = vunpack.c.l.b16 %v33
    %v79 = vunpack.c.l.b16 %v34
    %v80 = vunpack.c.l.b16 %v35
    %v81 = vunpack.c.l.b16 %v36
    %v82 = vunpack.c.l.b16 %v37
    %v83 = vunpack.c.l.b16 %v38
    %v84 = vunpack.c.l.b16 %v39
    %v85 = vunpack.c.l.b16 %v40
    %v86 = vunpack.c.l.b16 %v41
    %v87 = vunpack.c.l.b16 %v42
    %v88 = vpack.c.b16 %v73, %v72
    %v89 = vpack.c.b16 %v75, %v74
    %v90 = vpack.c.b16 %v77, %v76
    %v91 = vpack.c.b16 %v79, %v78
    %v92 = vpack.c.b16 %v81, %v80
    %v93 = vpack.c.b16 %v83, %v82
    %v94 = vpack.c.b16 %v85, %v84
    %v95 = vpack.c.b16 %v87, %v86
    %104 = vmatprep.subr.bf16.mxu0 0
    %105 = vmatpush1.bf16.msra.mxu0 %v88
    %106 = vmatprep.subr.bf16.mxu0 0
    %107 = vmatpush1.bf16.msra.mxu0 %v89
    %108 = vmatprep.subr.bf16.mxu0 0
    %109 = vmatpush1.bf16.msra.mxu0 %v90
    %110 = vmatprep.subr.bf16.mxu0 0
    %111 = vmatpush1.bf16.msra.mxu0 %v91
    %112 = vmatprep.subr.bf16.mxu0 0
    %113 = vmatpush1.bf16.msra.mxu0 %v92
    %114 = vmatprep.subr.bf16.mxu0 0
    %115 = vmatpush1.bf16.msra.mxu0 %v93
    %116 = vmatprep.subr.bf16.mxu0 0
    %117 = vmatpush1.bf16.msra.mxu0 %v94
    %118 = vmatprep.subr.bf16.mxu0 0
    %119 = vmatpush1.bf16.msra.mxu0 %v95
    %120 = vmatprep.subr.bf16.mxu0 0
    %121 = vmatpush1.bf16.msra.mxu0 0
    %122 = vmatprep.subr.bf16.mxu0 0
    %123 = vmatpush1.bf16.msra.mxu0 0
    %124 = vmatprep.subr.bf16.mxu0 0
    %125 = vmatpush1.bf16.msra.mxu0 0
    %126 = vmatprep.subr.bf16.mxu0 0
    %127 = vmatpush1.bf16.msra.mxu0 0
    %128 = vmatprep.subr.bf16.mxu0 0
    %129 = vmatpush1.bf16.msra.mxu0 0
    %130 = vmatprep.subr.bf16.mxu0 0
    %131 = vmatpush1.bf16.msra.mxu0 0
    %132 = vmatprep.subr.bf16.mxu0 0
    %133 = vmatpush1.bf16.msra.mxu0 0
    %134 = vmatprep.subr.bf16.mxu0 0
    %135 = vmatpush1.bf16.msra.mxu0 0
    %136 = vmatprep.mubr.bf16.mxu0 0
    %137 = vmatmul.mubr.bf16.gmra.mrb[0].mxu0 %v54
    %v138 = vpop.f32.mrb[0].mxu0
    %v139 = vadd.f32 %v48, %v138
    %v140 = vpop.f32.mrb[0].mxu0
    %v141 = vpop.f32.mrb[0].mxu0
    %v142 = vadd.f32 %v48, %v141
    %v143 = vpop.f32.mrb[0].mxu0
    %144 = vdwg.mxu0
    %v145 = vtanh.pop %v139
    %v146 = vtanh.pop %v142
    %v147 = vpack.c.bf16 %v146, %v145
    %148 = vst [vmem:[#allocation2] sm:$0xff] %v147
  $region25: #{mlp_lm_forward.1} parent=0 // pred_fallthru
    _
  %v149 = vld [vmem:[#allocation2] sm:$0xff]
  %v150 = vld [vmem:[%s3] sm:$0xf]
  %v151 = vld [vmem:[%s3 + $0x4] sm:$0xf]
  %v152 = vld [vmem:[%s3 + $0x8] sm:$0xf]
  %v153 = vld [vmem:[%s3 + $0xc] sm:$0xf]
  %v154 = vld [vmem:[%s3 + $0x10] sm:$0xf]
  %v155 = vld [vmem:[%s3 + $0x14] sm:$0xf]
  %v156 = vld [vmem:[%s3 + $0x18] sm:$0xf]
  %v157 = vld [vmem:[%s3 + $0x1c] sm:$0xf]
  %v158 = vld [vmem:[%s3 + $0x20] sm:$0xf]
  %v159 = vld [vmem:[%s3 + $0x24] sm:$0xf]
  %v160 = vld [vmem:[%s3 + $0x28] sm:$0xf]
  %v161 = vld [vmem:[%s3 + $0x2c] sm:$0xf]
  %v162 = vld [vmem:[%s3 + $0x30] sm:$0xf]
  %v163 = vld [vmem:[%s3 + $0x34] sm:$0xf]
  %v164 = vld [vmem:[%s3 + $0x38] sm:$0xf]
  %v165 = vld [vmem:[%s3 + $0x3c] sm:$0xf]
  %v166 = vld [vmem:[%s4] sm:$0x1]
  %v168 = vlaneseq
  %v169 = vshrl.u32 %v168, 7
  %v170 = vsub.s32 0, %v169
  %v171 = vrot.slane %v166, %v170
  %v189 = vunpack.c.l.b16 %v150
  %v190 = vunpack.c.l.b16 %v151
  %v191 = vunpack.c.l.b16 %v152
  %v192 = vunpack.c.l.b16 %v153
  %v193 = vunpack.c.l.b16 %v154
  %v194 = vunpack.c.l.b16 %v155
  %v195 = vunpack.c.l.b16 %v156
  %v196 = vunpack.c.l.b16 %v157
  %v197 = vunpack.c.l.b16 %v158
  %v198 = vunpack.c.l.b16 %v159
  %v199 = vunpack.c.l.b16 %v160
  %v200 = vunpack.c.l.b16 %v161
  %v201 = vunpack.c.l.b16 %v162
  %v202 = vunpack.c.l.b16 %v163
  %v203 = vunpack.c.l.b16 %v164
  %v204 = vunpack.c.l.b16 %v165
  %v205 = vpack.c.b16 %v190, %v189
  %v206 = vpack.c.b16 %v192, %v191
  %v207 = vpack.c.b16 %v194, %v193
  %v208 = vpack.c.b16 %v196, %v195
  %v209 = vpack.c.b16 %v198, %v197
  %v210 = vpack.c.b16 %v200, %v199
  %v211 = vpack.c.b16 %v202, %v201
  %v212 = vpack.c.b16 %v204, %v203
  %221 = vmatprep.subr.bf16.mxu0 0
  %222 = vmatpush1.bf16.msra.mxu0 %v205
  %223 = vmatprep.subr.bf16.mxu0 0
  %224 = vmatpush1.bf16.msra.mxu0 %v206
  %225 = vmatprep.subr.bf16.mxu0 0
  %226 = vmatpush1.bf16.msra.mxu0 %v207
  %227 = vmatprep.subr.bf16.mxu0 0
  %228 = vmatpush1.bf16.msra.mxu0 %v208
  %229 = vmatprep.subr.bf16.mxu0 0
  %230 = vmatpush1.bf16.msra.mxu0 %v209
  %231 = vmatprep.subr.bf16.mxu0 0
  %232 = vmatpush1.bf16.msra.mxu0 %v210
  %233 = vmatprep.subr.bf16.mxu0 0
  %234 = vmatpush1.bf16.msra.mxu0 %v211
  %235 = vmatprep.subr.bf16.mxu0 0
  %236 = vmatpush1.bf16.msra.mxu0 %v212
  %237 = vmatprep.subr.bf16.mxu0 0
  %238 = vmatpush1.bf16.msra.mxu0 0
  %239 = vmatprep.subr.bf16.mxu0 0
  %240 = vmatpush1.bf16.msra.mxu0 0
  %241 = vmatprep.subr.bf16.mxu0 0
  %242 = vmatpush1.bf16.msra.mxu0 0
  %243 = vmatprep.subr.bf16.mxu0 0
  %244 = vmatpush1.bf16.msra.mxu0 0
  %245 = vmatprep.subr.bf16.mxu0 0
  %246 = vmatpush1.bf16.msra.mxu0 0
  %247 = vmatprep.subr.bf16.mxu0 0
  %248 = vmatpush1.bf16.msra.mxu0 0
  %249 = vmatprep.subr.bf16.mxu0 0
  %250 = vmatpush1.bf16.msra.mxu0 0
  %251 = vmatprep.subr.bf16.mxu0 0
  %252 = vmatpush1.bf16.msra.mxu0 0
  %253 = vmatprep.mubr.bf16.mxu0 0
  %254 = vmatmul.mubr.bf16.gmra.mrb[0].mxu0 %v149
  %v255 = vpop.f32.mrb[0].mxu0
  %v256 = vadd.f32 %v171, %v255
  %v257 = vpop.f32.mrb[0].mxu0
  %v258 = vpop.f32.mrb[0].mxu0
  %v259 = vadd.f32 %v171, %v258
  %v260 = vpop.f32.mrb[0].mxu0
  %261 = vdwg.mxu0
  %v262 = vpack.c.bf16 %v259, %v256
  %v264 = vunpack.c.l.b16 %v262
  %v265 = vunpack.c.h.b16 %v262
  %v266 = vpack.c.b16 %v264, %v264
  %v267 = vpack.c.b16 %v265, %v265
  %270 = vst [vmem:[%s5] sm:$0xf] %v266
  %271 = vst [vmem:[%s5 + $0x4] sm:$0xf] %v267
  // Predicated region
  $region26: #{mlp_lm_forward.1} parent=0 // pred_check
    _
  $region27: #{mlp_lm_forward.1} parent=0 // pred_check_branch
    %273 = sbr.rel (0) target = $region29
  $region28: #{mlp_lm_forward.1} parent=0 // pred_region
    _
  $region29: #{mlp_lm_forward.1} parent=0 // pred_fallthru
    _
  // Predicated region
  $region30: #{mlp_lm_forward.1} parent=0 // pred_check
    _
  $region31: #{mlp_lm_forward.1} parent=0 // pred_check_branch
    %275 = sbr.rel (0) target = $region33
  $region32: #{mlp_lm_forward.1} parent=0 // pred_region
    _
  $region33: #{mlp_lm_forward.1} parent=0 // pred_fallthru
    _

</llo_original>
